<compile_context>
chip_gen: v7x
topology: tpu7x:2x2x1
jax: 0.10.0
libtpu: 0.0.40
codegen_flags: <defaults>
</compile_context>

<pallas_src>
import jax
import jax.numpy as jnp
from jax.experimental import pallas as pl
from jax.experimental.pallas import tpu as pltpu

KH = KW = 3  # default kernel_size when pixel_shuffle=False


def _mish_exact(x):
    # PyTorch Mish: x * tanh(softplus(x)); logaddexp(x, 0) is a stable softplus.
    return x * jnp.tanh(jnp.logaddexp(x, 0.0))


def _mish_fast(x):
    # mish(x) = x * tanh(softplus(x)) = x * (t - 1) / (t + 1),  t = (1 + e^x)^2
    # One EUP exp + approx reciprocal instead of exp + log + tanh.
    e = jnp.exp(jnp.minimum(x, 20.0))            # clamp so t never overflows
    t = (1.0 + e) * (1.0 + e)
    y = x * (t - 1.0) * pl.reciprocal(t + 1.0, approx=True)
    return jnp.where(x > 20.0, x, y)             # for x > 20, mish(x) == x in f32


def _upsample_conv_kernel(xr_ref, uwk_ref, uh3_ref, b_ref, bias_ref, o_ref,
                          ck_ref):
    """Fused bilinear-x2 upsample + 3x3 'same' conv + bias + Mish for one strip.

    xr_ref  : (1, H, W*Cin)             input rows, channel-interleaved (bf16)
    uwk_ref : (W*Cin, (W2+2)*Cin)       width upsample + zero-pad matrix (bf16)
    uh3_ref : (1, TH, 3*H)              height-upsample rows of this strip,
                                        3 vertical taps concatenated (bf16)
    b_ref   : (3, (W2+2)*Cin, W2*Cout)  banded (Toeplitz) conv weights (bf16)
    bias_ref: (1, W2*Cout)              bias tiled along the width (f32)
    o_ref   : (1, TH, W2*Cout)          NHWC-flattened output strip (f32)
    ck_ref  : (3*H, W2*Cout)            per-batch scratch: width-conv partials
                                        Ck[kh] stacked along rows (bf16)
    """
    h_in = xr_ref.shape[1]

    # ---- per-batch (strip-invariant) work, done once at the first strip ----
    @pl.when(pl.program_id(1) == 0)
    def _():
        # width upsample + zero pad (channel-interleaved columns):
        #   xw[h, q*Cin + ci] = sum_w uw_pad[q, w] * x[ci, h, w]
        xw = jnp.dot(xr_ref[0], uwk_ref[...], preferred_element_type=jnp.float32)
        xw = xw.astype(jnp.bfloat16)
        # fold the banded conv weights of each vertical tap kh:
        #   Ck[kh][h, j*Cout+co] = sum_{q,ci} xw[h, q*Cin+ci] * B[kh][q*Cin+ci, .]
        for kh in range(KH):
            ck = jnp.dot(xw, b_ref[kh], preferred_element_type=jnp.float32)
            ck_ref[kh * h_in:(kh + 1) * h_in, :] = ck.astype(ck_ref.dtype)

    # ---- per-strip: one (TH, 3H) x (3H, W2*Cout) matmul fuses the height ----
    # upsample with the 3 vertical conv taps; bias folded in; Mish epilogue;
    # fully lane-dense (256-wide) f32 store.
    acc = jnp.dot(uh3_ref[0], ck_ref[...], preferred_element_type=jnp.float32)
    acc = acc + bias_ref[...]
    o_ref[0] = _mish_fast(acc).astype(o_ref.dtype)


def _bilinear_matrix(n_in, n_out):
    # nn.UpsamplingBilinear2d uses align_corners=True:
    #   src = out_idx * (n_in - 1) / (n_out - 1)
    src = jnp.arange(n_out, dtype=jnp.float32) * ((n_in - 1) / (n_out - 1))
    i0 = jnp.floor(src).astype(jnp.int32)
    i1 = jnp.minimum(i0 + 1, n_in - 1)
    f = src - i0.astype(jnp.float32)
    rows = jnp.arange(n_out)
    m = jnp.zeros((n_out, n_in), jnp.float32)
    m = m.at[rows, i0].add(1.0 - f)
    m = m.at[rows, i1].add(f)
    return m


def _pick_strip_height(h2):
    # Whole image in one strip when it fits the MXU-friendly 64-256 row range;
    # otherwise the largest multiple-of-8 divisor <= 256.
    if h2 <= 256:
        return h2
    for cand in range(256, 7, -8):
        if h2 % cand == 0:
            return cand
    return h2


def upsample_conv_forward(x_nchw, weight_oihw, bias):
    """UpsampleConv forward (NCHW in, NCHW out)."""
    N, Cin, H, W = x_nchw.shape
    Cout = weight_oihw.shape[0]
    H2, W2 = 2 * H, 2 * W
    Q = W2 + 2                                   # zero-padded upsampled width

    TH = _pick_strip_height(H2)
    n_strips = H2 // TH

    # ---- precomputed, data-independent operands (resident in VMEM) ----------
    # width upsample + zero pad, channel-interleaved: (W*Cin, Q*Cin)
    uw = _bilinear_matrix(W, W2)
    uw_pad = jnp.zeros((Q, W), jnp.float32).at[1:W2 + 1].set(uw)
    uwk = jnp.kron(uw_pad.T, jnp.eye(Cin, dtype=jnp.float32)).astype(jnp.bfloat16)

    # height upsample + zero pad, per strip with the KH vertical taps
    # concatenated along columns: uh3[s, r, kh*H + h] = uh_pad[s*TH + r + kh, h]
    uh = _bilinear_matrix(H, H2)
    uh_pad = jnp.zeros((H2 + 2, H), jnp.float32).at[1:H2 + 1].set(uh)
    row_idx = (jnp.arange(n_strips)[:, None, None] * TH
               + jnp.arange(TH)[None, :, None]
               + jnp.arange(KH)[None, None, :])           # (n_strips, TH, KH)
    uh3 = uh_pad[row_idx].reshape(n_strips, TH, KH * H).astype(jnp.bfloat16)

    # banded (Toeplitz) conv weights:
    #   B[kh, q*Cin+ci, j*Cout+co] = weight[co, ci, kh, q-j] if q-j in {0,1,2}
    w_t = jnp.transpose(weight_oihw.astype(jnp.float32), (2, 3, 1, 0))  # (KH,KW,Cin,Cout)
    d = jnp.arange(Q)[:, None] - jnp.arange(W2)[None, :]                # (Q, W2)
    band = w_t[:, jnp.clip(d, 0, KW - 1), :, :]                         # (KH,Q,W2,Cin,Cout)
    band = jnp.where(((d >= 0) & (d < KW))[None, :, :, None, None], band, 0.0)
    bmat = jnp.transpose(band, (0, 1, 3, 2, 4)).reshape(KH, Q * Cin, W2 * Cout)
    bmat = bmat.astype(jnp.bfloat16)

    bias_t = jnp.tile(bias.reshape(1, Cout).astype(jnp.float32), (1, W2))  # (1, W2*Cout)

    # input rows, channel-interleaved along width: xr[n, h, w*Cin + ci]  (bf16)
    xr = jnp.transpose(x_nchw, (0, 2, 3, 1)).reshape(N, H, W * Cin)
    xr = xr.astype(jnp.bfloat16)

    out_flat = pl.pallas_call(
        _upsample_conv_kernel,
        out_shape=jax.ShapeDtypeStruct((N, H2, W2 * Cout), jnp.float32),
        grid_spec=pltpu.PrefetchScalarGridSpec(
            num_scalar_prefetch=0,
            grid=(N, n_strips),
            in_specs=[
                pl.BlockSpec((1, H, W * Cin), lambda n, s: (n, 0, 0)),
                pl.BlockSpec((W * Cin, Q * Cin), lambda n, s: (0, 0)),
                pl.BlockSpec((1, TH, KH * H), lambda n, s: (s, 0, 0)),
                pl.BlockSpec((KH, Q * Cin, W2 * Cout), lambda n, s: (0, 0, 0)),
                pl.BlockSpec((1, W2 * Cout), lambda n, s: (0, 0)),
            ],
            out_specs=pl.BlockSpec((1, TH, W2 * Cout), lambda n, s: (n, s, 0)),
            scratch_shapes=[pltpu.VMEM((KH * H, W2 * Cout), jnp.bfloat16)],
        ),
        compiler_params=pltpu.CompilerParams(
            # batch axis parallel (v7x 2 TCs each take a batch); strip axis
            # arbitrary because the Ck scratch is carried across strips.
            dimension_semantics=("parallel", "arbitrary"),
            vmem_limit_bytes=32 * 1024 * 1024,   # actual per-step footprint ~1 MiB
        ),
    )(xr, uwk, uh3, bmat, bias_t)

    # NHWC-flat -> NCHW (single XLA permute; W2 < 128 lanes so an in-kernel
    # NCHW store would be a masked narrow vst).
    return jnp.transpose(out_flat.reshape(N, H2, W2, Cout), (0, 3, 1, 2))


# ---------------------------- pure-JAX reference -----------------------------
def bilinear_upsample_2x(x_nhwc):
    N, H, W, C = x_nhwc.shape
    uh = _bilinear_matrix(H, 2 * H)
    uw = _bilinear_matrix(W, 2 * W)
    x = jnp.einsum('oh,nhwc->nowc', uh, x_nhwc)
    x = jnp.einsum('pw,nowc->nopc', uw, x)
    return x


def reference_forward(x_nchw, weight_oihw, bias):
    x = jnp.transpose(x_nchw, (0, 2, 3, 1)).astype(jnp.float32)
    x_up = bilinear_upsample_2x(x)
    w_hwio = jnp.transpose(weight_oihw, (2, 3, 1, 0)).astype(jnp.float32)
    y = jax.lax.conv_general_dilated(
        x_up, w_hwio, window_strides=(1, 1), padding='SAME',
        dimension_numbers=('NHWC', 'HWIO', 'NHWC'))
    y = y + bias.reshape(1, 1, 1, -1)
    y = _mish_exact(y)
    return jnp.transpose(y, (0, 3, 1, 2))


if __name__ == "__main__":
    key = jax.random.PRNGKey(0)
    kx, kw_, kb = jax.random.split(key, 3)

    N, Cin, H, W = 2, 4, 16, 16
    Cout = 8

    x = jax.random.normal(kx, (N, Cin, H, W), dtype=jnp.float32)
    # Deterministic synthetic parameters (PyTorch Conv2d layout: OIHW + bias).
    weight = jax.random.normal(kw_, (Cout, Cin, KH, KW), dtype=jnp.float32) * 0.1
    bias = jax.random.normal(kb, (Cout,), dtype=jnp.float32) * 0.1

    y = jax.jit(upsample_conv_forward)(x, weight, bias)
    y = jax.block_until_ready(y)

    y_ref = reference_forward(x, weight, bias)
    assert y.shape == (N, Cout, 2 * H, 2 * W), y.shape
    # All MXU operands (input, upsample matrices, conv weights) are bf16 with
    # f32 accumulation + approx-reciprocal Mish -> slightly loosened tolerance
    # vs. a pure-f32 path.
    max_err = float(jnp.max(jnp.abs(y - y_ref)))
    assert jnp.allclose(y, y_ref, atol=4e-2, rtol=4e-2), max_err

    print("KERNEL_OK")
</pallas_src>

<mosaic_0001>
module attributes {stable_mosaic.version = 11 : i64} {
  func.func private @main(%arg0: i32) attributes {dimension_semantics = [#tpu.dimension_semantics<core_parallel>], iteration_bounds = array<i64: 2>, tpu.core_type = #tpu.core_type<sc_scalar_subcore>, window_params = []} {
    return
  }
}

module attributes {stable_mosaic.version = 11 : i64} {
  func.func private @main(%arg0: i32) attributes {dimension_semantics = [#tpu.dimension_semantics<core_parallel>], iteration_bounds = array<i64: 2>, tpu.core_type = #tpu.core_type<sc_scalar_subcore>, window_params = []} {
    return
  }
}

module attributes {stable_mosaic.version = 11 : i64} {
  func.func @_upsample_conv_kernel(%arg0: i32, %arg1: i32, %arg2: memref<1x16x64xbf16, #tpu.memory_space<vmem>>, %arg3: memref<64x136xbf16, #tpu.memory_space<vmem>>, %arg4: memref<1x32x48xbf16, #tpu.memory_space<vmem>>, %arg5: memref<3x136x256xbf16, #tpu.memory_space<vmem>>, %arg6: memref<1x256xf32, #tpu.memory_space<vmem>>, %arg7: memref<1x32x256xf32, #tpu.memory_space<vmem>>, %arg8: memref<48x256xbf16, #tpu.memory_space<vmem>>) attributes {dimension_semantics = [#tpu.dimension_semantics<parallel>, #tpu.dimension_semantics<arbitrary>], iteration_bounds = array<i64: 2, 1>, scalar_prefetch = 0 : i64, scratch_operands = 1 : i64, tpu.core_type = #tpu.core_type<tc>, window_params = [{transform_indices = @transform_0, window_bounds = array<i64: 1, 16, 64>}, {pipeline_mode = #tpu.pipeline_mode<synchronous>, transform_indices = @transform_1, window_bounds = array<i64: 64, 136>}, {transform_indices = @transform_2, window_bounds = array<i64: 1, 32, 48>}, {pipeline_mode = #tpu.pipeline_mode<synchronous>, transform_indices = @transform_3, window_bounds = array<i64: 3, 136, 256>}, {pipeline_mode = #tpu.pipeline_mode<synchronous>, transform_indices = @transform_4, window_bounds = array<i64: 1, 256>}, {transform_indices = @transform_5, window_bounds = array<i64: 1, 32, 256>}]} {
    %c0_i32 = arith.constant 0 : i32
    %0 = arith.cmpi eq, %arg1, %c0_i32 : i32
    %1 = arith.extui %0 : i1 to i32
    %c0_i32_0 = arith.constant 0 : i32
    %2 = arith.cmpi ne, %1, %c0_i32_0 : i32
    scf.if %2 {
      %c0_16 = arith.constant 0 : index
      %c0_17 = arith.constant 0 : index
      %c0_18 = arith.constant 0 : index
      %31 = vector.load %arg2[%c0_16, %c0_17, %c0_18] : memref<1x16x64xbf16, #tpu.memory_space<vmem>>, vector<1x16x64xbf16>
      %32 = vector.shape_cast %31 : vector<1x16x64xbf16> to vector<16x64xbf16>
      %c0_19 = arith.constant 0 : index
      %c0_20 = arith.constant 0 : index
      %33 = vector.load %arg3[%c0_19, %c0_20] : memref<64x136xbf16, #tpu.memory_space<vmem>>, vector<64x136xbf16>
      %cst_21 = arith.constant dense<0.000000e+00> : vector<16x136xf32>
      %34 = tpu.matmul %32, %33, %cst_21 {dimension_numbers = #tpu.dot_dimension_numbers<[1], [0], [0], [1], [0, 0, 1, 1], [], []>} : vector<16x64xbf16>, vector<64x136xbf16>, vector<16x136xf32> -> vector<16x136xf32>
      %35 = arith.truncf %34 : vector<16x136xf32> to vector<16x136xbf16>
      %c0_22 = arith.constant 0 : index
      %c0_23 = arith.constant 0 : index
      %c0_24 = arith.constant 0 : index
      %36 = vector.load %arg5[%c0_22, %c0_23, %c0_24] : memref<3x136x256xbf16, #tpu.memory_space<vmem>>, vector<1x136x256xbf16>
      %37 = vector.shape_cast %36 : vector<1x136x256xbf16> to vector<136x256xbf16>
      %cst_25 = arith.constant dense<0.000000e+00> : vector<16x256xf32>
      %38 = tpu.matmul %35, %37, %cst_25 {dimension_numbers = #tpu.dot_dimension_numbers<[1], [0], [0], [1], [0, 0, 1, 1], [], []>} : vector<16x136xbf16>, vector<136x256xbf16>, vector<16x256xf32> -> vector<16x256xf32>
      %39 = arith.truncf %38 : vector<16x256xf32> to vector<16x256xbf16>
      %c0_26 = arith.constant 0 : index
      %c0_27 = arith.constant 0 : index
      %40 = vector.load %arg8[%c0_26, %c0_27] : memref<48x256xbf16, #tpu.memory_space<vmem>>, vector<16x256xbf16>
      tpu.vector_store %arg8[%c0_26, %c0_27], %39 {strides = array<i32>} : memref<48x256xbf16, #tpu.memory_space<vmem>>, vector<16x256xbf16>,
      %c1 = arith.constant 1 : index
      %c0_28 = arith.constant 0 : index
      %c0_29 = arith.constant 0 : index
      %41 = vector.load %arg5[%c1, %c0_28, %c0_29] : memref<3x136x256xbf16, #tpu.memory_space<vmem>>, vector<1x136x256xbf16>
      %42 = vector.shape_cast %41 : vector<1x136x256xbf16> to vector<136x256xbf16>
      %cst_30 = arith.constant dense<0.000000e+00> : vector<16x256xf32>
      %43 = tpu.matmul %35, %42, %cst_30 {dimension_numbers = #tpu.dot_dimension_numbers<[1], [0], [0], [1], [0, 0, 1, 1], [], []>} : vector<16x136xbf16>, vector<136x256xbf16>, vector<16x256xf32> -> vector<16x256xf32>
      %44 = arith.truncf %43 : vector<16x256xf32> to vector<16x256xbf16>
      %c16 = arith.constant 16 : index
      %c0_31 = arith.constant 0 : index
      %45 = vector.load %arg8[%c16, %c0_31] : memref<48x256xbf16, #tpu.memory_space<vmem>>, vector<16x256xbf16>
      tpu.vector_store %arg8[%c16, %c0_31], %44 {strides = array<i32>} : memref<48x256xbf16, #tpu.memory_space<vmem>>, vector<16x256xbf16>,
      %c2 = arith.constant 2 : index
      %c0_32 = arith.constant 0 : index
      %c0_33 = arith.constant 0 : index
      %46 = vector.load %arg5[%c2, %c0_32, %c0_33] : memref<3x136x256xbf16, #tpu.memory_space<vmem>>, vector<1x136x256xbf16>
      %47 = vector.shape_cast %46 : vector<1x136x256xbf16> to vector<136x256xbf16>
      %cst_34 = arith.constant dense<0.000000e+00> : vector<16x256xf32>
      %48 = tpu.matmul %35, %47, %cst_34 {dimension_numbers = #tpu.dot_dimension_numbers<[1], [0], [0], [1], [0, 0, 1, 1], [], []>} : vector<16x136xbf16>, vector<136x256xbf16>, vector<16x256xf32> -> vector<16x256xf32>
      %49 = arith.truncf %48 : vector<16x256xf32> to vector<16x256xbf16>
      %c32 = arith.constant 32 : index
      %c0_35 = arith.constant 0 : index
      %50 = vector.load %arg8[%c32, %c0_35] : memref<48x256xbf16, #tpu.memory_space<vmem>>, vector<16x256xbf16>
      tpu.vector_store %arg8[%c32, %c0_35], %49 {strides = array<i32>} : memref<48x256xbf16, #tpu.memory_space<vmem>>, vector<16x256xbf16>,
    } else {
    }
    %c0 = arith.constant 0 : index
    %c0_1 = arith.constant 0 : index
    %c0_2 = arith.constant 0 : index
    %3 = vector.load %arg4[%c0, %c0_1, %c0_2] : memref<1x32x48xbf16, #tpu.memory_space<vmem>>, vector<1x32x48xbf16>
    %4 = vector.shape_cast %3 : vector<1x32x48xbf16> to vector<32x48xbf16>
    %c0_3 = arith.constant 0 : index
    %c0_4 = arith.constant 0 : index
    %5 = vector.load %arg8[%c0_3, %c0_4] : memref<48x256xbf16, #tpu.memory_space<vmem>>, vector<48x256xbf16>
    %cst = arith.constant dense<0.000000e+00> : vector<32x256xf32>
    %6 = tpu.matmul %4, %5, %cst {dimension_numbers = #tpu.dot_dimension_numbers<[1], [0], [0], [1], [0, 0, 1, 1], [], []>} : vector<32x48xbf16>, vector<48x256xbf16>, vector<32x256xf32> -> vector<32x256xf32>
    %c0_5 = arith.constant 0 : index
    %c0_6 = arith.constant 0 : index
    %7 = vector.load %arg6[%c0_5, %c0_6] : memref<1x256xf32, #tpu.memory_space<vmem>>, vector<1x256xf32>
    %8 = vector.broadcast %7 : vector<1x256xf32> to vector<32x256xf32>
    %9 = arith.addf %6, %8 : vector<32x256xf32>
    %cst_7 = arith.constant 2.000000e+01 : f32
    %10 = vector.broadcast %cst_7 : f32 to vector<32x256xf32>
    %11 = arith.minimumf %9, %10 : vector<32x256xf32>
    %12 = math.exp %11 : vector<32x256xf32>
    %cst_8 = arith.constant 1.000000e+00 : f32
    %13 = vector.broadcast %cst_8 : f32 to vector<32x256xf32>
    %14 = arith.addf %13, %12 : vector<32x256xf32>
    %cst_9 = arith.constant 1.000000e+00 : f32
    %15 = vector.broadcast %cst_9 : f32 to vector<32x256xf32>
    %16 = arith.addf %15, %12 : vector<32x256xf32>
    %17 = arith.mulf %14, %16 : vector<32x256xf32>
    %cst_10 = arith.constant 1.000000e+00 : f32
    %18 = vector.broadcast %cst_10 : f32 to vector<32x256xf32>
    %19 = arith.subf %17, %18 : vector<32x256xf32>
    %20 = arith.mulf %9, %19 : vector<32x256xf32>
    %cst_11 = arith.constant 1.000000e+00 : f32
    %21 = vector.broadcast %cst_11 : f32 to vector<32x256xf32>
    %22 = arith.addf %17, %21 : vector<32x256xf32>
    %23 = tpu.reciprocal %22 {approx = true} : vector<32x256xf32> -> vector<32x256xf32>
    %24 = arith.mulf %20, %23 : vector<32x256xf32>
    %cst_12 = arith.constant 2.000000e+01 : f32
    %25 = vector.broadcast %cst_12 : f32 to vector<32x256xf32>
    %26 = arith.cmpf ogt, %9, %25 : vector<32x256xf32>
    %27 = arith.select %26, %9, %24 : vector<32x256xi1>, vector<32x256xf32>
    %c0_13 = arith.constant 0 : index
    %c0_14 = arith.constant 0 : index
    %c0_15 = arith.constant 0 : index
    %28 = vector.load %arg7[%c0_13, %c0_14, %c0_15] : memref<1x32x256xf32, #tpu.memory_space<vmem>>, vector<1x32x256xf32>
    %29 = vector.shape_cast %28 : vector<1x32x256xf32> to vector<32x256xf32>
    %30 = vector.shape_cast %27 : vector<32x256xf32> to vector<1x32x256xf32>
    tpu.vector_store %arg7[%c0_13, %c0_14, %c0_15], %30 {strides = array<i32>} : memref<1x32x256xf32, #tpu.memory_space<vmem>>, vector<1x32x256xf32>,
    return
  }
  func.func @transform_0(%arg0: i32, %arg1: i32) -> (i32, i32, i32) {
    %c0_i32 = arith.constant 0 : i32
    %c0_i32_0 = arith.constant 0 : i32
    %c0_i32_1 = arith.constant 0 : i32
    return %arg0, %c0_i32, %c0_i32_0 : i32, i32, i32
  }
  func.func @transform_1(%arg0: i32, %arg1: i32) -> (i32, i32) {
    %c0_i32 = arith.constant 0 : i32
    %c0_i32_0 = arith.constant 0 : i32
    %c0_i32_1 = arith.constant 0 : i32
    return %c0_i32, %c0_i32_0 : i32, i32
  }
  func.func @transform_2(%arg0: i32, %arg1: i32) -> (i32, i32, i32) {
    %c0_i32 = arith.constant 0 : i32
    %c0_i32_0 = arith.constant 0 : i32
    %c0_i32_1 = arith.constant 0 : i32
    return %arg1, %c0_i32, %c0_i32_0 : i32, i32, i32
  }
  func.func @transform_3(%arg0: i32, %arg1: i32) -> (i32, i32, i32) {
    %c0_i32 = arith.constant 0 : i32
    %c0_i32_0 = arith.constant 0 : i32
    %c0_i32_1 = arith.constant 0 : i32
    %c0_i32_2 = arith.constant 0 : i32
    return %c0_i32, %c0_i32_0, %c0_i32_1 : i32, i32, i32
  }
  func.func @transform_4(%arg0: i32, %arg1: i32) -> (i32, i32) {
    %c0_i32 = arith.constant 0 : i32
    %c0_i32_0 = arith.constant 0 : i32
    %c0_i32_1 = arith.constant 0 : i32
    return %c0_i32, %c0_i32_0 : i32, i32
  }
  func.func @transform_5(%arg0: i32, %arg1: i32) -> (i32, i32, i32) {
    %c0_i32 = arith.constant 0 : i32
    %c0_i32_0 = arith.constant 0 : i32
    return %arg0, %arg1, %c0_i32 : i32, i32, i32
  }
}

</mosaic_0001>

<llo_original>
// kernel: upsample_conv_forward.1
$region0: #{upsample_conv_forward.1}
  #allocation0 [shape = 'u32[]', space=smem, size = 0x4, offset = 0x4, fixed_abs, tag = 'smem constant byte address 0x4 - core index']
  #allocation1 [shape = 'u32[144,128]{1,0:T(1,128)}', space=vmem, size = 0x12000, scoped, tag = 'internal scratch']
  #allocation2 [shape = 'bf16[48,256]{1,0:T(16,128)(2,1)}', space=vmem, size = 0x6000, scoped, tag = 'scratch operand']
  %s0 = inlined_call_operand.vmem [shape: bf16[2,16,64], index: 0, kind: input, shape index: {}]
  %s1 = inlined_call_operand.vmem [shape: bf16[64,136], index: 1, kind: input, shape index: {}]
  %s2 = inlined_call_operand.vmem [shape: bf16[1,32,48], index: 2, kind: input, shape index: {}]
  %s3 = inlined_call_operand.vmem [shape: bf16[3,136,256], index: 3, kind: input, shape index: {}]
  %s4 = inlined_call_operand.vmem [shape: f32[1,256], index: 4, kind: input, shape index: {}]
  %s5 = inlined_call_operand.vmem [shape: f32[2,32,256], index: 5, kind: output, shape index: {}]
  %s6 = sld [smem:[#allocation0]]
  $region57: #{upsample_conv_forward.1} parent=0
    _
  %s8 = ssub.s32 1, %s6
  %s9 = scalar_select 0, %s8, %s6
  loop: start=0, step=1, limit=4
  $region2: #{upsample_conv_forward.1} parent=0 // loop_pre_header
    _
  $region3: #{upsample_conv_forward.1} parent=0 // loop_header
    %s11 = sphi 0, %s15
    %p12 = scmp.ge.s32.totalorder %s11, 4
    %s18 = sphi 0, %s30
    %s19 = sphi 0, %s26
    %s20 = sphi 0, %s18
    %s21 = sphi 0, %s19
    %s22 = sphi 0, %s20
    %s23 = sphi 0, %s21
    %s33 = sphi 0, %s35
    %s36 = sphi 0, %s33
    %s37 = sphi 0, %s36
    %s53 = sphi 0, %s37
    %s57 = sphi 0, %s57
    %s59 = sphi 0, %s57
    %s60 = sphi 0, %s59
    %s74 = sphi 0, %s60
    %s80 = sphi 0, %s82
    %s83 = sphi 0, %s80
    %s84 = sphi 0, %s83
    %s100 = sphi 0, %s84
    %s104 = sphi 0, %s104
    %s106 = sphi 0, %s104
    %s107 = sphi 0, %s106
    %s121 = sphi 0, %s107
    %s125 = sphi 0, %s125
    %s127 = sphi 0, %s125
    %s128 = sphi 0, %s127
    %s142 = sphi 0, %s128
    %s150 = sphi 0, %s152
    %s153 = sphi 0, %s150
    %s154 = sphi 0, %s153
    %s170 = sphi 0, %s154
  $region4: #{upsample_conv_forward.1} parent=0 // loop_header_branch
    %14 = sbr.rel (%p12) target = $region8
  $region5: #{upsample_conv_forward.1} parent=0 // loop_body
    %s16 = ssub.s32 %s11, 1
    %s17 = ssub.s32 %s11, 2
    %s24 = sadd.s32 1, %s19
    %p25 = scmp.ge.s32.totalorder %s24, 1
    %s26 = scalar_select %p25, 0, %s24
    %s27 = sadd.s32 1, %s18
    %s28 = scalar_select %p25, %s27, %s18
    %p29 = scmp.ge.s32.totalorder %s28, 2
    %s30 = scalar_select %p29, 0, %s28
    %s31 = ssub.s32 %s18, %s30
    %p32 = scmp.eq.s32.totalorder %s31, 0
    %s34 = sadd.s32 %s33, 1
    %s35 = scalar_select %p32, %s33, %s34
    %p38 = pneg %p32
    %p39 = scmp.eq.s32.totalorder %s11, 1
    %p40 = por %p38, %p39
    %p41 = scmp.ne.s32.totalorder %s33, %s36
    %p42 = scmp.eq.s32.totalorder %s11, 0
    %p43 = por %p41, %p42
    %p44 = scmp.ne.s32.totalorder %s33, %s36
    %p45 = scmp.eq.s32.totalorder %s16, 1
    %p46 = por %p44, %p45
    %p47 = scmp.ne.s32.totalorder %s36, %s37
    %p48 = scmp.eq.s32.totalorder %s16, 0
    %p49 = por %p47, %p48
    %p50 = scmp.ne.s32.totalorder %s36, %s37
    %p51 = scmp.eq.s32.totalorder %s17, 1
    %p52 = por %p50, %p51
    %p54 = scmp.ne.s32.totalorder %s37, %s53
    %p55 = scmp.eq.s32.totalorder %s17, 0
    %p56 = por %p54, %p55
    %s58 = sadd.s32 %s57, 1
    %p61 = scmp.eq.s32.totalorder %s11, 1
    %p62 = scmp.ne.s32.totalorder %s57, %s59
    %p63 = scmp.eq.s32.totalorder %s11, 0
    %p64 = por %p62, %p63
    %p65 = scmp.ne.s32.totalorder %s57, %s59
    %p66 = scmp.eq.s32.totalorder %s16, 1
    %p67 = por %p65, %p66
    %p68 = scmp.ne.s32.totalorder %s59, %s60
    %p69 = scmp.eq.s32.totalorder %s16, 0
    %p70 = por %p68, %p69
    %p71 = scmp.ne.s32.totalorder %s59, %s60
    %p72 = scmp.eq.s32.totalorder %s17, 1
    %p73 = por %p71, %p72
    %p75 = scmp.ne.s32.totalorder %s60, %s74
    %p76 = scmp.eq.s32.totalorder %s17, 0
    %p77 = por %p75, %p76
    %s78 = ssub.s32 %s19, %s26
    %p79 = scmp.eq.s32.totalorder %s78, 0
    %s81 = sadd.s32 %s80, 1
    %s82 = scalar_select %p79, %s80, %s81
    %p85 = pneg %p79
    %p86 = scmp.eq.s32.totalorder %s11, 1
    %p87 = por %p85, %p86
    %p88 = scmp.ne.s32.totalorder %s80, %s83
    %p89 = scmp.eq.s32.totalorder %s11, 0
    %p90 = por %p88, %p89
    %p91 = scmp.ne.s32.totalorder %s80, %s83
    %p92 = scmp.eq.s32.totalorder %s16, 1
    %p93 = por %p91, %p92
    %p94 = scmp.ne.s32.totalorder %s83, %s84
    %p95 = scmp.eq.s32.totalorder %s16, 0
    %p96 = por %p94, %p95
    %p97 = scmp.ne.s32.totalorder %s83, %s84
    %p98 = scmp.eq.s32.totalorder %s17, 1
    %p99 = por %p97, %p98
    %p101 = scmp.ne.s32.totalorder %s84, %s100
    %p102 = scmp.eq.s32.totalorder %s17, 0
    %p103 = por %p101, %p102
    %s105 = sadd.s32 %s104, 1
    %p108 = scmp.eq.s32.totalorder %s11, 1
    %p109 = scmp.ne.s32.totalorder %s104, %s106
    %p110 = scmp.eq.s32.totalorder %s11, 0
    %p111 = por %p109, %p110
    %p112 = scmp.ne.s32.totalorder %s104, %s106
    %p113 = scmp.eq.s32.totalorder %s16, 1
    %p114 = por %p112, %p113
    %p115 = scmp.ne.s32.totalorder %s106, %s107
    %p116 = scmp.eq.s32.totalorder %s16, 0
    %p117 = por %p115, %p116
    %p118 = scmp.ne.s32.totalorder %s106, %s107
    %p119 = scmp.eq.s32.totalorder %s17, 1
    %p120 = por %p118, %p119
    %p122 = scmp.ne.s32.totalorder %s107, %s121
    %p123 = scmp.eq.s32.totalorder %s17, 0
    %p124 = por %p122, %p123
    %s126 = sadd.s32 %s125, 1
    %p129 = scmp.eq.s32.totalorder %s11, 1
    %p130 = scmp.ne.s32.totalorder %s125, %s127
    %p131 = scmp.eq.s32.totalorder %s11, 0
    %p132 = por %p130, %p131
    %p133 = scmp.ne.s32.totalorder %s125, %s127
    %p134 = scmp.eq.s32.totalorder %s16, 1
    %p135 = por %p133, %p134
    %p136 = scmp.ne.s32.totalorder %s127, %s128
    %p137 = scmp.eq.s32.totalorder %s16, 0
    %p138 = por %p136, %p137
    %p139 = scmp.ne.s32.totalorder %s127, %s128
    %p140 = scmp.eq.s32.totalorder %s17, 1
    %p141 = por %p139, %p140
    %p143 = scmp.ne.s32.totalorder %s128, %s142
    %p144 = scmp.eq.s32.totalorder %s17, 0
    %p145 = por %p143, %p144
    %s146 = ssub.s32 %s18, %s30
    %s147 = ssub.s32 %s19, %s26
    %s148 = sor.u32 %s146, %s147
    %p149 = scmp.eq.s32.totalorder %s148, 0
    %s151 = sadd.s32 %s150, 1
    %s152 = scalar_select %p149, %s150, %s151
    %p155 = pneg %p149
    %p156 = scmp.eq.s32.totalorder %s11, 1
    %p157 = por %p155, %p156
    %p158 = scmp.ne.s32.totalorder %s150, %s153
    %p159 = scmp.eq.s32.totalorder %s11, 0
    %p160 = por %p158, %p159
    %p161 = scmp.ne.s32.totalorder %s150, %s153
    %p162 = scmp.eq.s32.totalorder %s16, 1
    %p163 = por %p161, %p162
    %p164 = scmp.ne.s32.totalorder %s153, %s154
    %p165 = scmp.eq.s32.totalorder %s16, 0
    %p166 = por %p164, %p165
    %p167 = scmp.ne.s32.totalorder %s153, %s154
    %p168 = scmp.eq.s32.totalorder %s17, 1
    %p169 = por %p167, %p168
    %p171 = scmp.ne.s32.totalorder %s154, %s170
    %p172 = scmp.eq.s32.totalorder %s17, 0
    %p173 = por %p171, %p172
    %p174 = scmp.le.s32.totalorder 1, %s11
    %p175 = scmp.lt.s32.totalorder %s11, 3
    %p176 = pnand %p174, %p175
    %p177 = pneg %p176
    // Predicated region
    $region9: #{upsample_conv_forward.1} parent=5 // pred_check
      _
    $region10: #{upsample_conv_forward.1} parent=5 // pred_check_branch
      %179 = sbr.rel (%p176) target = $region12
    $region11: #{upsample_conv_forward.1} parent=5 // pred_region
      %s180 = ssub.s32 %s11, 1
      // Predicated region
      $region13: #{upsample_conv_forward.1} parent=11 // pred_check
        %p181 = pneg %p70
      $region14: #{upsample_conv_forward.1} parent=11 // pred_check_branch
        %183 = sbr.rel (%p181) target = $region16
      $region15: #{upsample_conv_forward.1} parent=11 // pred_region
        _
      $region16: #{upsample_conv_forward.1} parent=11 // pred_fallthru
        _
      // Predicated region
      $region17: #{upsample_conv_forward.1} parent=11 // pred_check
        %p184 = pneg %p96
      $region18: #{upsample_conv_forward.1} parent=11 // pred_check_branch
        %186 = sbr.rel (%p184) target = $region20
      $region19: #{upsample_conv_forward.1} parent=11 // pred_region
        %p187 = scmp.lt.s32.totalorder %s21, 0
        %s188 = scalar_select %p187, %s21, 0
        %s189 = smul.addr %s188, 4
        %s190 = smul.addr %s189, 4
        %s191 = scalar_lea.vmem %s2, %s190
      $region20: #{upsample_conv_forward.1} parent=11 // pred_fallthru
        _
      // Predicated region
      $region21: #{upsample_conv_forward.1} parent=11 // pred_check
        %p192 = pneg %p117
      $region22: #{upsample_conv_forward.1} parent=11 // pred_check_branch
        %194 = sbr.rel (%p192) target = $region24
      $region23: #{upsample_conv_forward.1} parent=11 // pred_region
        _
      $region24: #{upsample_conv_forward.1} parent=11 // pred_fallthru
        _
      // Predicated region
      $region25: #{upsample_conv_forward.1} parent=11 // pred_check
        %p195 = pneg %p138
      $region26: #{upsample_conv_forward.1} parent=11 // pred_check_branch
        %197 = sbr.rel (%p195) target = $region28
      $region27: #{upsample_conv_forward.1} parent=11 // pred_region
        _
      $region28: #{upsample_conv_forward.1} parent=11 // pred_fallthru
        _
    $region12: #{upsample_conv_forward.1} parent=5 // pred_fallthru
      _
    %p198 = scmp.lt.s32.totalorder %s11, 2
    // Predicated region
    $region29: #{upsample_conv_forward.1} parent=5 // pred_check
      %p199 = pneg %p198
    $region30: #{upsample_conv_forward.1} parent=5 // pred_check_branch
      %201 = sbr.rel (%p199) target = $region32
    $region31: #{upsample_conv_forward.1} parent=5 // pred_region
      // Predicated region
      $region33: #{upsample_conv_forward.1} parent=31 // pred_check
        %p202 = pneg %p43
      $region34: #{upsample_conv_forward.1} parent=31 // pred_check_branch
        %204 = sbr.rel (%p202) target = $region36
      $region35: #{upsample_conv_forward.1} parent=31 // pred_region
        %p205 = scmp.lt.s32.totalorder %s18, 1
        %s206 = scalar_select %p205, %s18, 1
        %s207 = smul.addr %s206, 2
        %s208 = smul.addr %s207, 4
        %s209 = scalar_lea.vmem %s0, %s208
      $region36: #{upsample_conv_forward.1} parent=31 // pred_fallthru
        _
    $region32: #{upsample_conv_forward.1} parent=5 // pred_fallthru
      _
    %p210 = scmp.le.s32.totalorder 1, %s11
    %p211 = scmp.lt.s32.totalorder %s11, 3
    %p212 = pnand %p210, %p211
    %p213 = pneg %p212
    // Predicated region
    $region37: #{upsample_conv_forward.1} parent=5 // pred_check
      _
    $region38: #{upsample_conv_forward.1} parent=5 // pred_check_branch
      %215 = sbr.rel (%p212) target = $region40
    $region39: #{upsample_conv_forward.1} parent=5 // pred_region
      %s216 = ssub.s32 %s11, 1
      %p217 = scmp.lt.s32.totalorder %s20, 1
      %s218 = scalar_select %p217, %s20, 1
      %s219 = smul.addr %s218, 2
      %s220 = smul.addr %s219, 4
      %s221 = scalar_lea.vmem %s0, %s220
      %p222 = pneg %p49
      %p223 = pneg %p46
      %p224 = pneg %p70
      %p225 = pneg %p67
      %p226 = scmp.lt.s32.totalorder %s21, 0
      %s227 = scalar_select %p226, %s21, 0
      %s228 = smul.addr %s227, 4
      %s229 = smul.addr %s228, 4
      %s230 = scalar_lea.vmem %s2, %s229
      %p231 = pneg %p96
      %p232 = pneg %p93
      %p233 = pneg %p117
      %p234 = pneg %p114
      %p235 = pneg %p138
      %p236 = pneg %p135
      %p237 = pneg %p166
      %p238 = pneg %p163
      %s239 = smul.u32 4, %s21
      %p240 = scmp.lt.s32.totalorder %s20, 1
      %s241 = scalar_select %p240, %s20, 1
      %p242 = scmp.lt.s32.totalorder %s239, 3
      %s243 = scalar_select %p242, %s239, 3
      %s244 = smul.addr %s243, 2
      %s245 = smul.addr %s241, 8
      %s246 = sadd.s32 %s244, %s245
      %s247 = smul.addr %s246, 8
      %s248 = scalar_lea.vmem %s5, %s247
      %p249 = scmp.lt.s32.totalorder %s20, 1
      %s250 = scalar_select %p249, %s20, 1
      %s251 = smul.addr %s250, 2
      %s252 = smul.addr %s251, 4
      %s253 = scalar_lea.vmem %s0, %s252
      %p254 = scmp.lt.s32.totalorder %s21, 0
      %s255 = scalar_select %p254, %s21, 0
      %s256 = smul.addr %s255, 4
      %s257 = smul.addr %s256, 4
      %s258 = scalar_lea.vmem %s2, %s257
      %s259 = smul.u32 4, %s21
      %p260 = scmp.lt.s32.totalorder %s20, 1
      %s261 = scalar_select %p260, %s20, 1
      %p262 = scmp.lt.s32.totalorder %s259, 3
      %s263 = scalar_select %p262, %s259, 3
      %s264 = smul.addr %s263, 2
      %s265 = smul.addr %s261, 8
      %s266 = sadd.s32 %s264, %s265
      %s267 = smul.addr %s266, 8
      %s268 = scalar_lea.vmem %s5, %s267
      %s269 = smul.u32 4, %s21
      %p271 = scmp.eq.s32.totalorder %s21, 0
      // Predicated region
      $region41: #{upsample_conv_forward.1} parent=39 // pred_check
        %p272 = pneg %p271
      $region42: #{upsample_conv_forward.1} parent=39 // pred_check_branch
        %274 = sbr.rel (%p272) target = $region44
      $region43: #{upsample_conv_forward.1} parent=39 // pred_region
        %v275 = vld [vmem:[%s253] sm:$0xf]
        %v276 = vld [vmem:[%s253 + $0x4] sm:$0xf]
        %v277 = vld [vmem:[%s1] sm:$0xff]
        %v278 = vld [vmem:[%s1 + $0x8] sm:$0xff]
        %v279 = vld [vmem:[%s1 + $0x10] sm:$0xff]
        %v280 = vld [vmem:[%s1 + $0x18] sm:$0xff]
        %v281 = vld [vmem:[%s1 + $0x20] sm:$0xff]
        %v282 = vld [vmem:[%s1 + $0x28] sm:$0xff]
        %v283 = vld [vmem:[%s1 + $0x30] sm:$0xff]
        %v284 = vld [vmem:[%s1 + $0x38] sm:$0xff]
        %v287 = vunpack.c.l.b16 %v275
        %v288 = vunpack.c.l.b16 %v276
        %v289 = vpack.c.b16 %v288, %v287
        %v298 = vunpack.c.l.b16 %v277
        %v299 = vunpack.c.h.b16 %v277
        %v300 = vunpack.c.l.b16 %v278
        %v301 = vunpack.c.h.b16 %v278
        %v302 = vunpack.c.l.b16 %v279
        %v303 = vunpack.c.h.b16 %v279
        %v304 = vunpack.c.l.b16 %v280
        %v305 = vunpack.c.h.b16 %v280
        %v306 = vunpack.c.l.b16 %v281
        %v307 = vunpack.c.h.b16 %v281
        %v308 = vunpack.c.l.b16 %v282
        %v309 = vunpack.c.h.b16 %v282
        %v310 = vunpack.c.l.b16 %v283
        %v311 = vunpack.c.h.b16 %v283
        %v312 = vunpack.c.l.b16 %v284
        %v313 = vunpack.c.h.b16 %v284
        %v314 = vpack.c.b16 %v300, %v298
        %v315 = vpack.c.b16 %v301, %v299
        %v316 = vpack.c.b16 %v304, %v302
        %v317 = vpack.c.b16 %v305, %v303
        %v318 = vpack.c.b16 %v308, %v306
        %v319 = vpack.c.b16 %v309, %v307
        %v320 = vpack.c.b16 %v312, %v310
        %v321 = vpack.c.b16 %v313, %v311
        %vm330 = vcmask 523264
        %v332 = vsel %vm330, %v289, 0
        %334 = vmatprep.subr.bf16.mxu0 %v315
        %335 = vmatpush1.bf16.msra.mxu0 %v314
        %336 = vmatprep.subr.bf16.mxu0 %v317
        %337 = vmatpush1.bf16.msra.mxu0 %v316
        %338 = vmatprep.subr.bf16.mxu0 %v319
        %339 = vmatpush1.bf16.msra.mxu0 %v318
        %340 = vmatprep.subr.bf16.mxu0 %v321
        %341 = vmatpush1.bf16.msra.mxu0 %v320
        %342 = vmatprep.subr.bf16.mxu0 0
        %343 = vmatpush1.bf16.msra.mxu0 0
        %344 = vmatprep.subr.bf16.mxu0 0
        %345 = vmatpush1.bf16.msra.mxu0 0
        %346 = vmatprep.subr.bf16.mxu0 0
        %347 = vmatpush1.bf16.msra.mxu0 0
        %348 = vmatprep.subr.bf16.mxu0 0
        %349 = vmatpush1.bf16.msra.mxu0 0
        %350 = vmatprep.subr.bf16.mxu0 0
        %351 = vmatpush1.bf16.msra.mxu0 0
        %352 = vmatprep.subr.bf16.mxu0 0
        %353 = vmatpush1.bf16.msra.mxu0 0
        %354 = vmatprep.subr.bf16.mxu0 0
        %355 = vmatpush1.bf16.msra.mxu0 0
        %356 = vmatprep.subr.bf16.mxu0 0
        %357 = vmatpush1.bf16.msra.mxu0 0
        %358 = vmatprep.subr.bf16.mxu0 0
        %359 = vmatpush1.bf16.msra.mxu0 0
        %360 = vmatprep.subr.bf16.mxu0 0
        %361 = vmatpush1.bf16.msra.mxu0 0
        %362 = vmatprep.subr.bf16.mxu0 0
        %363 = vmatpush1.bf16.msra.mxu0 0
        %364 = vmatprep.subr.bf16.mxu0 0
        %365 = vmatpush1.bf16.msra.mxu0 0
        %366 = vmatprep.mubr.bf16.mxu0 0
        %367 = vmatmul.mubr.bf16.gmra.mrb[0].mxu0 %v332
        %v368 = vpop.f32.mrb[0].mxu0
        %v369 = vadd.f32 0.0, %v368
        %v370 = vpop.f32.mrb[0].mxu0
        %v371 = vadd.f32 0.0, %v370
        %v372 = vpop.f32.mrb[0].mxu0
        %v373 = vadd.f32 0.0, %v372
        %v374 = vpop.f32.mrb[0].mxu0
        %v375 = vadd.f32 0.0, %v374
        %376 = vdwg.mxu0
        %v377 = vpack.c.bf16 %v373, %v369
        %v378 = vpack.c.bf16 %v375, %v371
        %v379 = vld [vmem:[%s3] sm:$0xff]
        %v380 = vld [vmem:[%s3 + $0x8] sm:$0xff]
        %v381 = vld [vmem:[%s3 + $0x10] sm:$0xff]
        %v382 = vld [vmem:[%s3 + $0x18] sm:$0xff]
        %v383 = vld [vmem:[%s3 + $0x20] sm:$0xff]
        %v384 = vld [vmem:[%s3 + $0x28] sm:$0xff]
        %v385 = vld [vmem:[%s3 + $0x30] sm:$0xff]
        %v386 = vld [vmem:[%s3 + $0x38] sm:$0xff]
        %v387 = vld [vmem:[%s3 + $0x40] sm:$0xff]
        %v388 = vld [vmem:[%s3 + $0x48] sm:$0xff]
        %v389 = vld [vmem:[%s3 + $0x50] sm:$0xff]
        %v390 = vld [vmem:[%s3 + $0x58] sm:$0xff]
        %v391 = vld [vmem:[%s3 + $0x60] sm:$0xff]
        %v392 = vld [vmem:[%s3 + $0x68] sm:$0xff]
        %v393 = vld [vmem:[%s3 + $0x70] sm:$0xff]
        %v394 = vld [vmem:[%s3 + $0x78] sm:$0xff]
        %v395 = vld [vmem:[%s3 + $0x80] sm:$0xff]
        %v413 = vunpack.c.l.b16 %v379
        %v414 = vunpack.c.h.b16 %v379
        %v415 = vunpack.c.l.b16 %v380
        %v416 = vunpack.c.h.b16 %v380
        %v417 = vunpack.c.l.b16 %v381
        %v418 = vunpack.c.h.b16 %v381
        %v419 = vunpack.c.l.b16 %v382
        %v420 = vunpack.c.h.b16 %v382
        %v421 = vunpack.c.l.b16 %v383
        %v422 = vunpack.c.h.b16 %v383
        %v423 = vunpack.c.l.b16 %v384
        %v424 = vunpack.c.h.b16 %v384
        %v425 = vunpack.c.l.b16 %v385
        %v426 = vunpack.c.h.b16 %v385
        %v427 = vunpack.c.l.b16 %v386
        %v428 = vunpack.c.h.b16 %v386
        %v429 = vunpack.c.l.b16 %v387
        %v430 = vunpack.c.h.b16 %v387
        %v431 = vunpack.c.l.b16 %v388
        %v432 = vunpack.c.h.b16 %v388
        %v433 = vunpack.c.l.b16 %v389
        %v434 = vunpack.c.h.b16 %v389
        %v435 = vunpack.c.l.b16 %v390
        %v436 = vunpack.c.h.b16 %v390
        %v437 = vunpack.c.l.b16 %v391
        %v438 = vunpack.c.h.b16 %v391
        %v439 = vunpack.c.l.b16 %v392
        %v440 = vunpack.c.h.b16 %v392
        %v441 = vunpack.c.l.b16 %v393
        %v442 = vunpack.c.h.b16 %v393
        %v443 = vunpack.c.l.b16 %v394
        %v444 = vunpack.c.h.b16 %v394
        %v445 = vunpack.c.l.b16 %v395
        %v446 = vunpack.c.h.b16 %v395
        %v447 = vpack.c.b16 %v415, %v413
        %v448 = vpack.c.b16 %v416, %v414
        %v449 = vpack.c.b16 %v419, %v417
        %v450 = vpack.c.b16 %v420, %v418
        %v451 = vpack.c.b16 %v423, %v421
        %v452 = vpack.c.b16 %v424, %v422
        %v453 = vpack.c.b16 %v427, %v425
        %v454 = vpack.c.b16 %v428, %v426
        %v455 = vpack.c.b16 %v431, %v429
        %v456 = vpack.c.b16 %v432, %v430
        %v457 = vpack.c.b16 %v435, %v433
        %v458 = vpack.c.b16 %v436, %v434
        %v459 = vpack.c.b16 %v439, %v437
        %v460 = vpack.c.b16 %v440, %v438
        %v461 = vpack.c.b16 %v443, %v441
        %v462 = vpack.c.b16 %v444, %v442
        %v463 = vpack.c.b16 %v445, %v445
        %v464 = vpack.c.b16 %v446, %v446
        %vm481 = vcmask 64512
        %v483 = vsel %vm481, %v378, 0
        %vm485 = vcmask 1043456
        %v487 = vsel %vm485, %v463, 0
        %v490 = vsel %vm485, %v464, 0
        %492 = vmatprep.subr.bf16.mxu0 %v448
        %493 = vmatpush1.bf16.msra.mxu0 %v447
        %494 = vmatprep.subr.bf16.mxu0 %v450
        %495 = vmatpush1.bf16.msra.mxu0 %v449
        %496 = vmatprep.subr.bf16.mxu0 %v452
        %497 = vmatpush1.bf16.msra.mxu0 %v451
        %498 = vmatprep.subr.bf16.mxu0 %v454
        %499 = vmatpush1.bf16.msra.mxu0 %v453
        %500 = vmatprep.subr.bf16.mxu0 %v456
        %501 = vmatpush1.bf16.msra.mxu0 %v455
        %502 = vmatprep.subr.bf16.mxu0 %v458
        %503 = vmatpush1.bf16.msra.mxu0 %v457
        %504 = vmatprep.subr.bf16.mxu0 %v460
        %505 = vmatpush1.bf16.msra.mxu0 %v459
        %506 = vmatprep.subr.bf16.mxu0 %v462
        %507 = vmatpush1.bf16.msra.mxu0 %v461
        %508 = vmatprep.subr.bf16.mxu0 %v490
        %509 = vmatpush1.bf16.msra.mxu0 %v487
        %510 = vmatprep.subr.bf16.mxu0 0
        %511 = vmatpush1.bf16.msra.mxu0 0
        %512 = vmatprep.subr.bf16.mxu0 0
        %513 = vmatpush1.bf16.msra.mxu0 0
        %514 = vmatprep.subr.bf16.mxu0 0
        %515 = vmatpush1.bf16.msra.mxu0 0
        %516 = vmatprep.subr.bf16.mxu0 0
        %517 = vmatpush1.bf16.msra.mxu0 0
        %518 = vmatprep.subr.bf16.mxu0 0
        %519 = vmatpush1.bf16.msra.mxu0 0
        %520 = vmatprep.subr.bf16.mxu0 0
        %521 = vmatpush1.bf16.msra.mxu0 0
        %522 = vmatprep.subr.bf16.mxu0 0
        %523 = vmatpush1.bf16.msra.mxu0 0
        %524 = vmatprep.mubr.bf16.mxu0 %v483
        %525 = vmatmul.mubr.bf16.gmra.mrb[0].mxu0 %v377
        %v526 = vpop.f32.mrb[0].mxu0
        %v527 = vadd.f32 0.0, %v526
        %v528 = vpop.f32.mrb[0].mxu0
        %v529 = vadd.f32 0.0, %v528
        %v530 = vpop.f32.mrb[0].mxu0
        %v531 = vadd.f32 0.0, %v530
        %v532 = vpop.f32.mrb[0].mxu0
        %v533 = vadd.f32 0.0, %v532
        %534 = vdwg.mxu0
        %v535 = vpack.c.bf16 %v531, %v527
        %v536 = vpack.c.bf16 %v533, %v529
        %537 = vst [vmem:[#allocation2] sm:$0xff] %v535
        %538 = vst [vmem:[#allocation2 + $0x8] sm:$0xff] %v536
        %s539 = scalar_lea.vmem %s3, 136
        %v540 = vld [vmem:[%s539] sm:$0xff]
        %v541 = vld [vmem:[%s539 + $0x8] sm:$0xff]
        %v542 = vld [vmem:[%s539 + $0x10] sm:$0xff]
        %v543 = vld [vmem:[%s539 + $0x18] sm:$0xff]
        %v544 = vld [vmem:[%s539 + $0x20] sm:$0xff]
        %v545 = vld [vmem:[%s539 + $0x28] sm:$0xff]
        %v546 = vld [vmem:[%s539 + $0x30] sm:$0xff]
        %v547 = vld [vmem:[%s539 + $0x38] sm:$0xff]
        %v548 = vld [vmem:[%s539 + $0x40] sm:$0xff]
        %v549 = vld [vmem:[%s539 + $0x48] sm:$0xff]
        %v550 = vld [vmem:[%s539 + $0x50] sm:$0xff]
        %v551 = vld [vmem:[%s539 + $0x58] sm:$0xff]
        %v552 = vld [vmem:[%s539 + $0x60] sm:$0xff]
        %v553 = vld [vmem:[%s539 + $0x68] sm:$0xff]
        %v554 = vld [vmem:[%s539 + $0x70] sm:$0xff]
        %v555 = vld [vmem:[%s539 + $0x78] sm:$0xff]
        %v556 = vld [vmem:[%s539 + $0x80] sm:$0xff]
        %v574 = vunpack.c.l.b16 %v540
        %v575 = vunpack.c.h.b16 %v540
        %v576 = vunpack.c.l.b16 %v541
        %v577 = vunpack.c.h.b16 %v541
        %v578 = vunpack.c.l.b16 %v542
        %v579 = vunpack.c.h.b16 %v542
        %v580 = vunpack.c.l.b16 %v543
        %v581 = vunpack.c.h.b16 %v543
        %v582 = vunpack.c.l.b16 %v544
        %v583 = vunpack.c.h.b16 %v544
        %v584 = vunpack.c.l.b16 %v545
        %v585 = vunpack.c.h.b16 %v545
        %v586 = vunpack.c.l.b16 %v546
        %v587 = vunpack.c.h.b16 %v546
        %v588 = vunpack.c.l.b16 %v547
        %v589 = vunpack.c.h.b16 %v547
        %v590 = vunpack.c.l.b16 %v548
        %v591 = vunpack.c.h.b16 %v548
        %v592 = vunpack.c.l.b16 %v549
        %v593 = vunpack.c.h.b16 %v549
        %v594 = vunpack.c.l.b16 %v550
        %v595 = vunpack.c.h.b16 %v550
        %v596 = vunpack.c.l.b16 %v551
        %v597 = vunpack.c.h.b16 %v551
        %v598 = vunpack.c.l.b16 %v552
        %v599 = vunpack.c.h.b16 %v552
        %v600 = vunpack.c.l.b16 %v553
        %v601 = vunpack.c.h.b16 %v553
        %v602 = vunpack.c.l.b16 %v554
        %v603 = vunpack.c.h.b16 %v554
        %v604 = vunpack.c.l.b16 %v555
        %v605 = vunpack.c.h.b16 %v555
        %v606 = vunpack.c.l.b16 %v556
        %v607 = vunpack.c.h.b16 %v556
        %v608 = vpack.c.b16 %v576, %v574
        %v609 = vpack.c.b16 %v577, %v575
        %v610 = vpack.c.b16 %v580, %v578
        %v611 = vpack.c.b16 %v581, %v579
        %v612 = vpack.c.b16 %v584, %v582
        %v613 = vpack.c.b16 %v585, %v583
        %v614 = vpack.c.b16 %v588, %v586
        %v615 = vpack.c.b16 %v589, %v587
        %v616 = vpack.c.b16 %v592, %v590
        %v617 = vpack.c.b16 %v593, %v591
        %v618 = vpack.c.b16 %v596, %v594
        %v619 = vpack.c.b16 %v597, %v595
        %v620 = vpack.c.b16 %v600, %v598
        %v621 = vpack.c.b16 %v601, %v599
        %v622 = vpack.c.b16 %v604, %v602
        %v623 = vpack.c.b16 %v605, %v603
        %v624 = vpack.c.b16 %v606, %v606
        %v625 = vpack.c.b16 %v607, %v607
        %v643 = vsel %vm485, %v624, 0
        %v646 = vsel %vm485, %v625, 0
        %648 = vmatprep.subr.bf16.mxu0 %v609
        %649 = vmatpush1.bf16.msra.mxu0 %v608
        %650 = vmatprep.subr.bf16.mxu0 %v611
        %651 = vmatpush1.bf16.msra.mxu0 %v610
        %652 = vmatprep.subr.bf16.mxu0 %v613
        %653 = vmatpush1.bf16.msra.mxu0 %v612
        %654 = vmatprep.subr.bf16.mxu0 %v615
        %655 = vmatpush1.bf16.msra.mxu0 %v614
        %656 = vmatprep.subr.bf16.mxu0 %v617
        %657 = vmatpush1.bf16.msra.mxu0 %v616
        %658 = vmatprep.subr.bf16.mxu0 %v619
        %659 = vmatpush1.bf16.msra.mxu0 %v618
        %660 = vmatprep.subr.bf16.mxu0 %v621
        %661 = vmatpush1.bf16.msra.mxu0 %v620
        %662 = vmatprep.subr.bf16.mxu0 %v623
        %663 = vmatpush1.bf16.msra.mxu0 %v622
        %664 = vmatprep.subr.bf16.mxu0 %v646
        %665 = vmatpush1.bf16.msra.mxu0 %v643
        %666 = vmatprep.subr.bf16.mxu0 0
        %667 = vmatpush1.bf16.msra.mxu0 0
        %668 = vmatprep.subr.bf16.mxu0 0
        %669 = vmatpush1.bf16.msra.mxu0 0
        %670 = vmatprep.subr.bf16.mxu0 0
        %671 = vmatpush1.bf16.msra.mxu0 0
        %672 = vmatprep.subr.bf16.mxu0 0
        %673 = vmatpush1.bf16.msra.mxu0 0
        %674 = vmatprep.subr.bf16.mxu0 0
        %675 = vmatpush1.bf16.msra.mxu0 0
        %676 = vmatprep.subr.bf16.mxu0 0
        %677 = vmatpush1.bf16.msra.mxu0 0
        %678 = vmatprep.subr.bf16.mxu0 0
        %679 = vmatpush1.bf16.msra.mxu0 0
        %680 = vmatprep.mubr.bf16.mxu0 %v483
        %681 = vmatmul.mubr.bf16.gmra.mrb[0].mxu0 %v377
        %v682 = vpop.f32.mrb[0].mxu0
        %v683 = vadd.f32 0.0, %v682
        %v684 = vpop.f32.mrb[0].mxu0
        %v685 = vadd.f32 0.0, %v684
        %v686 = vpop.f32.mrb[0].mxu0
        %v687 = vadd.f32 0.0, %v686
        %v688 = vpop.f32.mrb[0].mxu0
        %v689 = vadd.f32 0.0, %v688
        %690 = vdwg.mxu0
        %v691 = vpack.c.bf16 %v687, %v683
        %v692 = vpack.c.bf16 %v689, %v685
        %693 = vst [vmem:[#allocation2 + $0x10] sm:$0xff] %v691
        %694 = vst [vmem:[#allocation2 + $0x18] sm:$0xff] %v692
        %s695 = scalar_lea.vmem %s3, 272
        %v696 = vld [vmem:[%s695] sm:$0xff]
        %v697 = vld [vmem:[%s695 + $0x8] sm:$0xff]
        %v698 = vld [vmem:[%s695 + $0x10] sm:$0xff]
        %v699 = vld [vmem:[%s695 + $0x18] sm:$0xff]
        %v700 = vld [vmem:[%s695 + $0x20] sm:$0xff]
        %v701 = vld [vmem:[%s695 + $0x28] sm:$0xff]
        %v702 = vld [vmem:[%s695 + $0x30] sm:$0xff]
        %v703 = vld [vmem:[%s695 + $0x38] sm:$0xff]
        %v704 = vld [vmem:[%s695 + $0x40] sm:$0xff]
        %v705 = vld [vmem:[%s695 + $0x48] sm:$0xff]
        %v706 = vld [vmem:[%s695 + $0x50] sm:$0xff]
        %v707 = vld [vmem:[%s695 + $0x58] sm:$0xff]
        %v708 = vld [vmem:[%s695 + $0x60] sm:$0xff]
        %v709 = vld [vmem:[%s695 + $0x68] sm:$0xff]
        %v710 = vld [vmem:[%s695 + $0x70] sm:$0xff]
        %v711 = vld [vmem:[%s695 + $0x78] sm:$0xff]
        %v712 = vld [vmem:[%s695 + $0x80] sm:$0xff]
        %v730 = vunpack.c.l.b16 %v696
        %v731 = vunpack.c.h.b16 %v696
        %v732 = vunpack.c.l.b16 %v697
        %v733 = vunpack.c.h.b16 %v697
        %v734 = vunpack.c.l.b16 %v698
        %v735 = vunpack.c.h.b16 %v698
        %v736 = vunpack.c.l.b16 %v699
        %v737 = vunpack.c.h.b16 %v699
        %v738 = vunpack.c.l.b16 %v700
        %v739 = vunpack.c.h.b16 %v700
        %v740 = vunpack.c.l.b16 %v701
        %v741 = vunpack.c.h.b16 %v701
        %v742 = vunpack.c.l.b16 %v702
        %v743 = vunpack.c.h.b16 %v702
        %v744 = vunpack.c.l.b16 %v703
        %v745 = vunpack.c.h.b16 %v703
        %v746 = vunpack.c.l.b16 %v704
        %v747 = vunpack.c.h.b16 %v704
        %v748 = vunpack.c.l.b16 %v705
        %v749 = vunpack.c.h.b16 %v705
        %v750 = vunpack.c.l.b16 %v706
        %v751 = vunpack.c.h.b16 %v706
        %v752 = vunpack.c.l.b16 %v707
        %v753 = vunpack.c.h.b16 %v707
        %v754 = vunpack.c.l.b16 %v708
        %v755 = vunpack.c.h.b16 %v708
        %v756 = vunpack.c.l.b16 %v709
        %v757 = vunpack.c.h.b16 %v709
        %v758 = vunpack.c.l.b16 %v710
        %v759 = vunpack.c.h.b16 %v710
        %v760 = vunpack.c.l.b16 %v711
        %v761 = vunpack.c.h.b16 %v711
        %v762 = vunpack.c.l.b16 %v712
        %v763 = vunpack.c.h.b16 %v712
        %v764 = vpack.c.b16 %v732, %v730
        %v765 = vpack.c.b16 %v733, %v731
        %v766 = vpack.c.b16 %v736, %v734
        %v767 = vpack.c.b16 %v737, %v735
        %v768 = vpack.c.b16 %v740, %v738
        %v769 = vpack.c.b16 %v741, %v739
        %v770 = vpack.c.b16 %v744, %v742
        %v771 = vpack.c.b16 %v745, %v743
        %v772 = vpack.c.b16 %v748, %v746
        %v773 = vpack.c.b16 %v749, %v747
        %v774 = vpack.c.b16 %v752, %v750
        %v775 = vpack.c.b16 %v753, %v751
        %v776 = vpack.c.b16 %v756, %v754
        %v777 = vpack.c.b16 %v757, %v755
        %v778 = vpack.c.b16 %v760, %v758
        %v779 = vpack.c.b16 %v761, %v759
        %v780 = vpack.c.b16 %v762, %v762
        %v781 = vpack.c.b16 %v763, %v763
        %v799 = vsel %vm485, %v780, 0
        %v802 = vsel %vm485, %v781, 0
        %804 = vmatprep.subr.bf16.mxu0 %v765
        %805 = vmatpush1.bf16.msra.mxu0 %v764
        %806 = vmatprep.subr.bf16.mxu0 %v767
        %807 = vmatpush1.bf16.msra.mxu0 %v766
        %808 = vmatprep.subr.bf16.mxu0 %v769
        %809 = vmatpush1.bf16.msra.mxu0 %v768
        %810 = vmatprep.subr.bf16.mxu0 %v771
        %811 = vmatpush1.bf16.msra.mxu0 %v770
        %812 = vmatprep.subr.bf16.mxu0 %v773
        %813 = vmatpush1.bf16.msra.mxu0 %v772
        %814 = vmatprep.subr.bf16.mxu0 %v775
        %815 = vmatpush1.bf16.msra.mxu0 %v774
        %816 = vmatprep.subr.bf16.mxu0 %v777
        %817 = vmatpush1.bf16.msra.mxu0 %v776
        %818 = vmatprep.subr.bf16.mxu0 %v779
        %819 = vmatpush1.bf16.msra.mxu0 %v778
        %820 = vmatprep.subr.bf16.mxu0 %v802
        %821 = vmatpush1.bf16.msra.mxu0 %v799
        %822 = vmatprep.subr.bf16.mxu0 0
        %823 = vmatpush1.bf16.msra.mxu0 0
        %824 = vmatprep.subr.bf16.mxu0 0
        %825 = vmatpush1.bf16.msra.mxu0 0
        %826 = vmatprep.subr.bf16.mxu0 0
        %827 = vmatpush1.bf16.msra.mxu0 0
        %828 = vmatprep.subr.bf16.mxu0 0
        %829 = vmatpush1.bf16.msra.mxu0 0
        %830 = vmatprep.subr.bf16.mxu0 0
        %831 = vmatpush1.bf16.msra.mxu0 0
        %832 = vmatprep.subr.bf16.mxu0 0
        %833 = vmatpush1.bf16.msra.mxu0 0
        %834 = vmatprep.subr.bf16.mxu0 0
        %835 = vmatpush1.bf16.msra.mxu0 0
        %836 = vmatprep.mubr.bf16.mxu0 %v483
        %837 = vmatmul.mubr.bf16.gmra.mrb[0].mxu0 %v377
        %v838 = vpop.f32.mrb[0].mxu0
        %v839 = vadd.f32 0.0, %v838
        %v840 = vpop.f32.mrb[0].mxu0
        %v841 = vadd.f32 0.0, %v840
        %v842 = vpop.f32.mrb[0].mxu0
        %v843 = vadd.f32 0.0, %v842
        %v844 = vpop.f32.mrb[0].mxu0
        %v845 = vadd.f32 0.0, %v844
        %846 = vdwg.mxu0
        %v847 = vpack.c.bf16 %v843, %v839
        %v848 = vpack.c.bf16 %v845, %v841
        %849 = vst [vmem:[#allocation2 + $0x20] sm:$0xff] %v847
        %850 = vst [vmem:[#allocation2 + $0x28] sm:$0xff] %v848
      $region44: #{upsample_conv_forward.1} parent=39 // pred_fallthru
        _
      %v851 = vld [vmem:[%s258] sm:$0xf]
      %v852 = vld [vmem:[%s258 + $0x4] sm:$0xf]
      %v853 = vld [vmem:[%s258 + $0x8] sm:$0xf]
      %v854 = vld [vmem:[%s258 + $0xc] sm:$0xf]
      %v855 = vld [vmem:[#allocation2] sm:$0xff]
      %v856 = vld [vmem:[#allocation2 + $0x8] sm:$0xff]
      %v857 = vld [vmem:[#allocation2 + $0x10] sm:$0xff]
      %v858 = vld [vmem:[#allocation2 + $0x18] sm:$0xff]
      %v859 = vld [vmem:[#allocation2 + $0x20] sm:$0xff]
      %v860 = vld [vmem:[#allocation2 + $0x28] sm:$0xff]
      %v861 = vld [vmem:[%s4] sm:$0x3]
      %v863 = vlaneseq
      %v864 = vshrl.u32 %v863, 7
      %v865 = vsub.s32 0, %v864
      %v866 = vrot.slane %v861, %v865
      %v867 = vlaneseq
      %v868 = vshrl.u32 %v867, 7
      %v869 = vsub.s32 1, %v868
      %v870 = vrot.slane %v861, %v869
      %v877 = vunpack.c.l.b16 %v851
      %v878 = vunpack.c.l.b16 %v852
      %v879 = vunpack.c.l.b16 %v853
      %v880 = vunpack.c.l.b16 %v854
      %v881 = vpack.c.b16 %v878, %v877
      %v882 = vpack.c.b16 %v880, %v879
      %vm883 = vcmask 392192
      %v885 = vsel %vm883, %v881, 0
      %v888 = vsel %vm883, %v882, 0
      %890 = vmatprep.subr.bf16.mxu0 %v856
      %891 = vmatpush1.bf16.msra.mxu0 %v855
      %892 = vmatprep.subr.bf16.mxu0 %v858
      %893 = vmatpush1.bf16.msra.mxu0 %v857
      %894 = vmatprep.subr.bf16.mxu0 %v860
      %895 = vmatpush1.bf16.msra.mxu0 %v859
      %896 = vmatprep.subr.bf16.mxu0 0
      %897 = vmatpush1.bf16.msra.mxu0 0
      %898 = vmatprep.subr.bf16.mxu0 0
      %899 = vmatpush1.bf16.msra.mxu0 0
      %900 = vmatprep.subr.bf16.mxu0 0
      %901 = vmatpush1.bf16.msra.mxu0 0
      %902 = vmatprep.subr.bf16.mxu0 0
      %903 = vmatpush1.bf16.msra.mxu0 0
      %904 = vmatprep.subr.bf16.mxu0 0
      %905 = vmatpush1.bf16.msra.mxu0 0
      %906 = vmatprep.subr.bf16.mxu0 0
      %907 = vmatpush1.bf16.msra.mxu0 0
      %908 = vmatprep.subr.bf16.mxu0 0
      %909 = vmatpush1.bf16.msra.mxu0 0
      %910 = vmatprep.subr.bf16.mxu0 0
      %911 = vmatpush1.bf16.msra.mxu0 0
      %912 = vmatprep.subr.bf16.mxu0 0
      %913 = vmatpush1.bf16.msra.mxu0 0
      %914 = vmatprep.subr.bf16.mxu0 0
      %915 = vmatpush1.bf16.msra.mxu0 0
      %916 = vmatprep.subr.bf16.mxu0 0
      %917 = vmatpush1.bf16.msra.mxu0 0
      %918 = vmatprep.subr.bf16.mxu0 0
      %919 = vmatpush1.bf16.msra.mxu0 0
      %920 = vmatprep.subr.bf16.mxu0 0
      %921 = vmatpush1.bf16.msra.mxu0 0
      %922 = vmatprep.mubr.bf16.mxu0 0
      %923 = vmatmul.mubr.bf16.gmra.mrb[0].mxu0 %v885
      %v924 = vpop.f32.mrb[0].mxu0
      %v925 = vadd.f32 %v866, %v924
      %v926 = vpop.f32.mrb[0].mxu0
      %v927 = vadd.f32 %v870, %v926
      %v928 = vpop.f32.mrb[0].mxu0
      %v929 = vadd.f32 %v866, %v928
      %v930 = vpop.f32.mrb[0].mxu0
      %v931 = vadd.f32 %v870, %v930
      %932 = vmatprep.mubr.bf16.mxu0 0
      %933 = vmatmul.mubr.bf16.gmra.mrb[0].mxu0 %v888
      %v934 = vpop.f32.mrb[0].mxu0
      %v935 = vadd.f32 %v866, %v934
      %v936 = vpop.f32.mrb[0].mxu0
      %v937 = vadd.f32 %v870, %v936
      %v938 = vpop.f32.mrb[0].mxu0
      %v939 = vadd.f32 %v866, %v938
      %v940 = vpop.f32.mrb[0].mxu0
      %v941 = vadd.f32 %v870, %v940
      %942 = vdwg.mxu0
      %v943 = vmin.f32 %v925, 20.0
      %v944 = vmin.f32 %v927, 20.0
      %v945 = vmin.f32 %v929, 20.0
      %v946 = vmin.f32 %v931, 20.0
      %v947 = vmin.f32 %v935, 20.0
      %v948 = vmin.f32 %v937, 20.0
      %v949 = vmin.f32 %v939, 20.0
      %v950 = vmin.f32 %v941, 20.0
      %v951 = vmul.f32 %v943, 1.442695
      %v952 = vpow.pop %v951
      %v953 = vmul.f32 %v944, 1.442695
      %v954 = vpow.pop %v953
      %v955 = vmul.f32 %v945, 1.442695
      %v956 = vpow.pop %v955
      %v957 = vmul.f32 %v946, 1.442695
      %v958 = vpow.pop %v957
      %v959 = vmul.f32 %v947, 1.442695
      %v960 = vpow.pop %v959
      %v961 = vmul.f32 %v948, 1.442695
      %v962 = vpow.pop %v961
      %v963 = vmul.f32 %v949, 1.442695
      %v964 = vpow.pop %v963
      %v965 = vmul.f32 %v950, 1.442695
      %v966 = vpow.pop %v965
      %v967 = vadd.f32 %v952, 1.0
      %v968 = vadd.f32 %v954, 1.0
      %v969 = vadd.f32 %v956, 1.0
      %v970 = vadd.f32 %v958, 1.0
      %v971 = vadd.f32 %v960, 1.0
      %v972 = vadd.f32 %v962, 1.0
      %v973 = vadd.f32 %v964, 1.0
      %v974 = vadd.f32 %v966, 1.0
      %v975 = vmul.f32 %v967, %v967
      %v976 = vmul.f32 %v968, %v968
      %v977 = vmul.f32 %v969, %v969
      %v978 = vmul.f32 %v970, %v970
      %v979 = vmul.f32 %v971, %v971
      %v980 = vmul.f32 %v972, %v972
      %v981 = vmul.f32 %v973, %v973
      %v982 = vmul.f32 %v974, %v974
      %v983 = vsub.f32 %v975, 1.0
      %v984 = vsub.f32 %v976, 1.0
      %v985 = vsub.f32 %v977, 1.0
      %v986 = vsub.f32 %v978, 1.0
      %v987 = vsub.f32 %v979, 1.0
      %v988 = vsub.f32 %v980, 1.0
      %v989 = vsub.f32 %v981, 1.0
      %v990 = vsub.f32 %v982, 1.0
      %v991 = vmul.f32 %v925, %v983
      %v992 = vmul.f32 %v927, %v984
      %v993 = vmul.f32 %v929, %v985
      %v994 = vmul.f32 %v931, %v986
      %v995 = vmul.f32 %v935, %v987
      %v996 = vmul.f32 %v937, %v988
      %v997 = vmul.f32 %v939, %v989
      %v998 = vmul.f32 %v941, %v990
      %v999 = vadd.f32 %v975, 1.0
      %v1000 = vadd.f32 %v976, 1.0
      %v1001 = vadd.f32 %v977, 1.0
      %v1002 = vadd.f32 %v978, 1.0
      %v1003 = vadd.f32 %v979, 1.0
      %v1004 = vadd.f32 %v980, 1.0
      %v1005 = vadd.f32 %v981, 1.0
      %v1006 = vadd.f32 %v982, 1.0
      %v1007 = vrcp.pop %v999
      %v1008 = vrcp.pop %v1000
      %v1009 = vrcp.pop %v1001
      %v1010 = vrcp.pop %v1002
      %v1011 = vrcp.pop %v1003
      %v1012 = vrcp.pop %v1004
      %v1013 = vrcp.pop %v1005
      %v1014 = vrcp.pop %v1006
      %v1015 = vmul.f32 %v991, %v1007
      %v1016 = vmul.f32 %v992, %v1008
      %v1017 = vmul.f32 %v993, %v1009
      %v1018 = vmul.f32 %v994, %v1010
      %v1019 = vmul.f32 %v995, %v1011
      %v1020 = vmul.f32 %v996, %v1012
      %v1021 = vmul.f32 %v997, %v1013
      %v1022 = vmul.f32 %v998, %v1014
      %vm1023 = vcmp.gt.f32.partialorder %v925, 20.0
      %vm1024 = vcmp.gt.f32.partialorder %v927, 20.0
      %vm1025 = vcmp.gt.f32.partialorder %v929, 20.0
      %vm1026 = vcmp.gt.f32.partialorder %v931, 20.0
      %vm1027 = vcmp.gt.f32.partialorder %v935, 20.0
      %vm1028 = vcmp.gt.f32.partialorder %v937, 20.0
      %vm1029 = vcmp.gt.f32.partialorder %v939, 20.0
      %vm1030 = vcmp.gt.f32.partialorder %v941, 20.0
      %v1031 = vsel %vm1023, %v925, %v1015
      %v1032 = vsel %vm1024, %v927, %v1016
      %v1033 = vsel %vm1025, %v929, %v1017
      %v1034 = vsel %vm1026, %v931, %v1018
      %v1035 = vsel %vm1027, %v935, %v1019
      %v1036 = vsel %vm1028, %v937, %v1020
      %v1037 = vsel %vm1029, %v939, %v1021
      %v1038 = vsel %vm1030, %v941, %v1022
      %1039 = vst [vmem:[%s268] sm:$0xff] %v1031
      %1040 = vst [vmem:[%s268 + $0x8] sm:$0xff] %v1032
      %1041 = vst [vmem:[%s268 + $0x10] sm:$0xff] %v1033
      %1042 = vst [vmem:[%s268 + $0x18] sm:$0xff] %v1034
      %1043 = vst [vmem:[%s268 + $0x20] sm:$0xff] %v1035
      %1044 = vst [vmem:[%s268 + $0x28] sm:$0xff] %v1036
      %1045 = vst [vmem:[%s268 + $0x30] sm:$0xff] %v1037
      %1046 = vst [vmem:[%s268 + $0x38] sm:$0xff] %v1038
      %s1047 = smul.u32 4, %s21
      %p1048 = scmp.lt.s32.totalorder %s20, 1
      %s1049 = scalar_select %p1048, %s20, 1
      %p1050 = scmp.lt.s32.totalorder %s1047, 3
      %s1051 = scalar_select %p1050, %s1047, 3
      %s1052 = smul.addr %s1051, 2
      %s1053 = smul.addr %s1049, 8
      %s1054 = sadd.s32 %s1052, %s1053
      %s1055 = smul.addr %s1054, 8
      %s1056 = scalar_lea.vmem %s5, %s1055
      // Predicated region
      $region45: #{upsample_conv_forward.1} parent=39 // pred_check
        %p1057 = pneg %p163
      $region46: #{upsample_conv_forward.1} parent=39 // pred_check_branch
        %1059 = sbr.rel (%p1057) target = $region48
      $region47: #{upsample_conv_forward.1} parent=39 // pred_region
        %s1060 = smul.u32 4, %s21
      $region48: #{upsample_conv_forward.1} parent=39 // pred_fallthru
        _
    $region40: #{upsample_conv_forward.1} parent=5 // pred_fallthru
      _
    %p1061 = scmp.le.s32.totalorder 2, %s11
    // Predicated region
    $region49: #{upsample_conv_forward.1} parent=5 // pred_check
      %p1062 = pneg %p1061
    $region50: #{upsample_conv_forward.1} parent=5 // pred_check_branch
      %1064 = sbr.rel (%p1062) target = $region52
    $region51: #{upsample_conv_forward.1} parent=5 // pred_region
      %s1065 = ssub.s32 %s11, 2
      // Predicated region
      $region53: #{upsample_conv_forward.1} parent=51 // pred_check
        %p1066 = pneg %p169
      $region54: #{upsample_conv_forward.1} parent=51 // pred_check_branch
        %1068 = sbr.rel (%p1066) target = $region56
      $region55: #{upsample_conv_forward.1} parent=51 // pred_region
        %s1069 = smul.u32 4, %s23
        %p1070 = scmp.lt.s32.totalorder %s22, 1
        %s1071 = scalar_select %p1070, %s22, 1
        %p1072 = scmp.lt.s32.totalorder %s1069, 3
        %s1073 = scalar_select %p1072, %s1069, 3
        %s1074 = smul.addr %s1073, 2
        %s1075 = smul.addr %s1071, 8
        %s1076 = sadd.s32 %s1074, %s1075
        %s1077 = smul.addr %s1076, 8
        %s1078 = scalar_lea.vmem %s5, %s1077
      $region56: #{upsample_conv_forward.1} parent=51 // pred_fallthru
        _
    $region52: #{upsample_conv_forward.1} parent=5 // pred_fallthru
      _
  $region6: #{upsample_conv_forward.1} parent=0 // loop_footer
    %s15 = sadd.s32 1, %s11
  $region7: #{upsample_conv_forward.1} parent=0 // loop_footer_branch
    %10 = sbr.rel target = $region3
  $region8: #{upsample_conv_forward.1} parent=0 // loop_exit
    _

</llo_original>
